<compile_context>
chip_gen: v7x
topology: tpu7x:2x2x1
jax: 0.10.0
libtpu: 0.0.40
codegen_flags: <defaults>
</compile_context>

<pallas_src>
import functools

import numpy as np
import jax
import jax.numpy as jnp
from jax.experimental import pallas as pl
from jax.experimental.pallas import tpu as pltpu

_TWO_PI = 2.0 * np.pi


# --------------------------------------------------------------------------
# Kernel
# --------------------------------------------------------------------------
def _circular_stats_kernel(a1_ref, a2_ref, enc_ref, out_ref, acc_ref, m_ref,
                           *, inv_tau, compute_dtype, fuse_mxu):
    """Online-softmax circular-encoding stats for two attention maps.

    a1_ref, a2_ref: (TB, TN)   input tiles (native dtype)             [VMEM]
    enc_ref:        (8, TN)    lane-major encode block                [VMEM]
    out_ref:        (TB, 8)    [cx1, sx1, cy1, sy1, cx2, sx2, cy2, sy2]
    acc_ref:        (2, TB, 8) f32 running [sum e*cos mx, ..., sum e] per map
    m_ref:          (2, TB, 1) f32 running row max of A/tau per map
    """
    k = pl.program_id(1)
    nk = pl.num_programs(1)
    tb = a1_ref.shape[0]

    @pl.when(k == 0)
    def _init():
        acc_ref[...] = jnp.zeros_like(acc_ref)
        m_ref[...] = jnp.full_like(m_ref, -jnp.inf)

    enc = enc_ref[...]                                     # resident (8, TN)

    def prep(a_raw, idx):
        # Scale + running max in f32 (exact); exp in compute_dtype: after the
        # max subtraction the dominant logits sit near 0, so a bf16 exp on
        # v6e/v7x costs ~nothing in accuracy while halving EUP pressure.
        a = a_raw.astype(jnp.float32) * inv_tau            # scalar mul, no divide
        m_prev = m_ref[idx]                                # (TB, 1)
        m_new = jnp.maximum(m_prev, jnp.max(a, axis=1, keepdims=True))
        e = jnp.exp((a - m_new).astype(compute_dtype))     # EUP
        return e, m_prev, m_new

    e1, m1_prev, m1_new = prep(a1_ref[...], 0)
    e2, m2_prev, m2_new = prep(a2_ref[...], 1)

    def contract(e):
        # (rows, TN) x (8, TN)^T -> (rows, 8): NT matmul on the MXU, f32 acc.
        return jax.lax.dot_general(
            e, enc, dimension_numbers=(((1,), (1,)), ((), ())),
            preferred_element_type=jnp.float32)

    if fuse_mxu:
        # One (2*TB, TN) stream: encode weights pushed to the MXU once per
        # grid step, one long stream for the LLO scheduler to hide EUP/VPU.
        s = contract(jnp.concatenate([e1, e2], axis=0))
        s1, s2 = s[:tb, :], s[tb:, :]
    else:
        # Sublane-unaligned concat for this TB/dtype -> two small dots instead.
        s1, s2 = contract(e1), contract(e2)

    # Online-softmax rescale of the running sums (exp(-inf) == 0 at k == 0).
    acc_ref[0] = jnp.exp(m1_prev - m1_new) * acc_ref[0] + s1
    acc_ref[1] = jnp.exp(m2_prev - m2_new) * acc_ref[1] + s2
    m_ref[0] = m1_new
    m_ref[1] = m2_new

    @pl.when(k == nk - 1)
    def _finalize():
        def normed(idx):
            acc = acc_ref[idx]
            # approx reciprocal: common positive scale on each (cos, sin)
            # pair -> cancels inside the downstream atan2.
            return acc[:, 0:4] * pl.reciprocal(acc[:, 4:5], approx=True)
        out_ref[:, 0:4] = normed(0)
        out_ref[:, 4:8] = normed(1)


# --------------------------------------------------------------------------
# Host-side helpers (encode matrix, generation-aware tiling / VMEM budget)
# --------------------------------------------------------------------------
def _make_encode_matrix(nx, ny, dtype):
    """Lane-major (8, nx*ny) encode matrix (row-major flatten, i*ny + j)."""
    mx = (np.arange(nx, dtype=np.float32) / nx) * _TWO_PI
    my = (np.arange(ny, dtype=np.float32) / ny) * _TWO_PI
    MX = np.broadcast_to(mx[:, None], (nx, ny)).reshape(-1)
    MY = np.broadcast_to(my[None, :], (nx, ny)).reshape(-1)
    enc = np.zeros((8, nx * ny), dtype=np.float32)
    enc[0], enc[1] = np.cos(MX), np.sin(MX)
    enc[2], enc[3] = np.cos(MY), np.sin(MY)
    enc[4] = 1.0                                           # softmax denominator row
    return jnp.asarray(enc, dtype=dtype)


def _tpu_generation():
    """(vmem_capacity_bytes, bf16_compute_ok) with conservative fallbacks."""
    vmem_cap = 64 << 20                                    # conservative: v7x per-TC
    try:
        vmem_cap = int(pltpu.get_tpu_info().vmem_capacity_bytes)
    except Exception:
        pass
    if vmem_cap < (32 << 20):
        vmem_cap = 64 << 20
    kind = ""
    try:
        kind = jax.devices()[0].device_kind.lower()
    except Exception:
        pass
    old_gen = any(t in kind for t in ("v2", "v3", "v4", "v5"))
    return vmem_cap, not old_gen


def _round_up(x, m):
    return ((x + m - 1) // m) * m


def _working_set_bytes(tb, tn, in_itemsize):
    """Scoped-VMEM estimate: 2 maps x 2 pipeline input buffers + ~6 live
    f32-sized (tb, tn) temporaries + lane-padded out/accumulator rows + enc."""
    per_row = tn * (4 * in_itemsize + 24) + 4 * 1024
    fixed = 2 * 8 * tn * 4 + (1 << 20)                     # enc double-buffer + slack
    return tb * per_row + fixed, per_row, fixed


def _pick_tiles(B, N, in_itemsize, vmem_cap_bytes):
    """Generation-aware (TB, TN) for the stats kernel."""
    LANE = 128
    # v7x: 64 MiB VMEM per TensorCore -> smaller working set; v5e/v6e:
    # 128 MiB -> bigger tiles to amortize the ~0.35 us/grid-step overhead.
    budget = (28 << 20) if vmem_cap_bytes <= (96 << 20) else (56 << 20)

    # Reduction (lane) tile: largest multiple of 128 dividing N, capped at a
    # few MiB per block; whole row when N is small or not lane-divisible.
    tn_cap = 8192
    if N <= tn_cap or N % LANE != 0:
        tn = N
    else:
        tn = LANE
        d = (min(N, tn_cap) // LANE) * LANE
        while d >= LANE:
            if N % d == 0:
                tn = d
                break
            d -= LANE

    _, per_row, fixed = _working_set_bytes(1, tn, in_itemsize)
    pack = {1: 32, 2: 16}.get(in_itemsize, 8)              # sublane packing of dtype
    tb = max(pack, ((budget - fixed) // per_row) // pack * pack)
    # Never collapse the batch grid to one block when B is large enough:
    # >= 2 blocks keeps the DMA pipeline overlapped, ~4 keeps both v7x
    # TensorCores fed via the "parallel" batch axis.
    if B >= 4 * pack:
        tb = min(tb, max(pack, _round_up(-(-B // 4), pack)))
    elif B >= 2 * pack:
        tb = min(tb, max(pack, _round_up(-(-B // 2), pack)))
    return min(tb, B), tn


def _vmem_limit_bytes(tb, tn, in_itemsize, vmem_cap_bytes):
    est, _, _ = _working_set_bytes(tb, tn, in_itemsize)
    return int(min(max(2 * est, 8 << 20), int(0.9 * vmem_cap_bytes)))


# --------------------------------------------------------------------------
# Public wrappers
# --------------------------------------------------------------------------
def get_centers_pair(A1, A2, tau=0.1, compute_dtype=None, force_tiles=None):
    """Pallas equivalent of CenterDistanceLoss.get_center for two maps.

    A1, A2: (B, nx, ny) attention maps.  Returns (c1, c2), each (B, 2) [x, y].
    """
    B, nx, ny = A1.shape
    N = nx * ny
    a1 = A1.reshape(B, N)                                  # native dtype on the wire
    a2 = A2.reshape(B, N)

    vmem_cap, bf16_ok = _tpu_generation()
    if compute_dtype is None:
        # bf16 exp/matmul on v6e/v7x (bf16 EUP); f32 on v5e and older.
        compute_dtype = jnp.bfloat16 if bf16_ok else jnp.float32
    compute_dtype = jnp.dtype(compute_dtype)

    if force_tiles is None:
        TB, TN = _pick_tiles(B, N, a1.dtype.itemsize, vmem_cap)
    else:
        TB, TN = force_tiles
    assert N % TN == 0, "TN must divide nx*ny"
    vmem_limit = _vmem_limit_bytes(TB, TN, a1.dtype.itemsize, vmem_cap)

    enc = _make_encode_matrix(nx, ny, compute_dtype)       # (8, N) lane-major
    # Fuse both maps into one MXU stream only when the sublane concat is
    # tile-aligned for the compute dtype (8 rows for f32, 16 for bf16).
    fuse_mxu = (TB % max(8, 32 // compute_dtype.itemsize) == 0)

    # NOTE: if B % TB != 0 the padded rows of the last batch block hold
    # undefined data; every accumulator/output here is strictly row-wise, so
    # garbage stays confined to the discarded OOB rows.
    grid = (pl.cdiv(B, TB), N // TN)

    stats = pl.pallas_call(
        functools.partial(_circular_stats_kernel,
                          inv_tau=1.0 / float(tau),
                          compute_dtype=compute_dtype,
                          fuse_mxu=fuse_mxu),
        out_shape=jax.ShapeDtypeStruct((B, 8), jnp.float32),
        grid_spec=pltpu.PrefetchScalarGridSpec(
            num_scalar_prefetch=0,
            grid=grid,
            in_specs=[
                pl.BlockSpec((TB, TN), lambda b, k: (b, k)),   # A1 tile
                pl.BlockSpec((TB, TN), lambda b, k: (b, k)),   # A2 tile
                pl.BlockSpec((8, TN), lambda b, k: (0, k)),    # encode block
            ],
            out_specs=pl.BlockSpec((TB, 8), lambda b, k: (b, 0)),
            scratch_shapes=[
                pltpu.VMEM((2, TB, 8), jnp.float32),           # running sums
                pltpu.VMEM((2, TB, 1), jnp.float32),           # running row max
            ],
        ),
        compiler_params=pltpu.CompilerParams(
            # TODO(synk): verify on v7x xprof that "parallel" actually shards
            # the batch axis across both TensorCores; switch that axis to
            # pltpu.CORE_PARALLEL if one TC sits idle.
            dimension_semantics=("parallel", "arbitrary"),
            vmem_limit_bytes=vmem_limit),
    )(a1, a2, enc)

    def _decode(s):
        dx = jnp.arctan2(s[:, 1], s[:, 0])
        dy = jnp.arctan2(s[:, 3], s[:, 2])
        dx = jnp.where(dx < 0, dx + _TWO_PI, dx) / _TWO_PI * nx
        dy = jnp.where(dy < 0, dy + _TWO_PI, dy) / _TWO_PI * ny
        return jnp.stack([dx, dy], axis=1)                 # (B, 2)

    return _decode(stats[:, 0:4]), _decode(stats[:, 4:8])


def center_distance_loss(center1, center2):
    """Pallas/JAX equivalent of CenterDistanceLoss.forward (tiny scalar glue)."""
    c1 = jnp.asarray(center1, jnp.float32)
    c2 = jnp.asarray(center2, jnp.float32)
    if c1.shape[0] != 1:                                   # matches the torch unsqueeze branch
        c1, c2 = c1[None], c2[None]
    dist = jnp.sum((c1 - c2) ** 2, axis=1)                 # ||.||_dim1 ** 2
    return jnp.mean(dist)


def center_distance_loss_from_maps(A1, A2, tau=0.1, compute_dtype=None,
                                   force_tiles=None):
    c1, c2 = get_centers_pair(A1, A2, tau, compute_dtype=compute_dtype,
                              force_tiles=force_tiles)
    return center_distance_loss(c1, c2)


# --------------------------------------------------------------------------
# Pure-JAX reference (verification only)
# --------------------------------------------------------------------------
def _reference_loss(a1, a2, tau):
    def center(A):
        _, nx, ny = A.shape
        Asm = jnp.exp(A / tau) / jnp.sum(jnp.exp(A / tau), axis=(1, 2), keepdims=True)
        mx = jnp.broadcast_to(
            (jnp.arange(nx, dtype=jnp.float32) / nx * _TWO_PI)[:, None], (nx, ny))
        my = jnp.broadcast_to(
            (jnp.arange(ny, dtype=jnp.float32) / ny * _TWO_PI)[None, :], (nx, ny))
        S = jnp.sum(Asm, axis=(1, 2))
        cx = jnp.sum(jnp.cos(mx)[None] * Asm, axis=(1, 2)) / S
        sx = jnp.sum(jnp.sin(mx)[None] * Asm, axis=(1, 2)) / S
        cy = jnp.sum(jnp.cos(my)[None] * Asm, axis=(1, 2)) / S
        sy = jnp.sum(jnp.sin(my)[None] * Asm, axis=(1, 2)) / S
        dx = jnp.arctan2(sx, cx)
        dy = jnp.arctan2(sy, cy)
        dx = jnp.where(dx < 0, dx + _TWO_PI, dx) / _TWO_PI * nx
        dy = jnp.where(dy < 0, dy + _TWO_PI, dy) / _TWO_PI * ny
        return jnp.stack([dx, dy], axis=1)

    c1, c2 = center(a1), center(a2)
    c1u, c2u = c1[None], c2[None]                          # shape[0] != 1 branch
    dist = jnp.linalg.norm(c1u - c2u, axis=1) ** 2
    return jnp.mean(dist)


if __name__ == "__main__":
    key = jax.random.PRNGKey(0)
    k1, k2, k3, k4 = jax.random.split(key, 4)
    tau = 0.1                                              # deterministic __init__ "parameter"

    # Small shape matching the module's intended (B, nx, ny) attention maps.
    B, nx, ny = 4, 16, 16
    A1 = jax.random.normal(k1, (B, nx, ny), dtype=jnp.float32)
    A2 = jax.random.normal(k2, (B, nx, ny), dtype=jnp.float32)

    ref = jax.block_until_ready(_reference_loss(A1, A2, tau))

    # 1) f32 compute path (exact-ish) against the pure-JAX reference.
    loss_f32 = jax.block_until_ready(
        center_distance_loss_from_maps(A1, A2, tau, compute_dtype=jnp.float32))
    np.testing.assert_allclose(np.asarray(loss_f32), np.asarray(ref),
                               rtol=1e-2, atol=1e-3)

    # 2) Generation-default path (bf16 exp/matmul on v6e/v7x, f32 on v5e).
    loss_auto = jax.block_until_ready(center_distance_loss_from_maps(A1, A2, tau))
    np.testing.assert_allclose(np.asarray(loss_auto), np.asarray(ref),
                               rtol=5e-2, atol=1e-1)

    # 3) Multi-block grid: exercises the pipelined batch axis, the fused
    #    two-map MXU stream and the online-softmax N reduction (forced tiles).
    B2, nx2, ny2 = 24, 16, 32
    C1 = jax.random.normal(k3, (B2, nx2, ny2), dtype=jnp.float32)
    C2 = jax.random.normal(k4, (B2, nx2, ny2), dtype=jnp.float32)
    loss_tiled = jax.block_until_ready(
        center_distance_loss_from_maps(C1, C2, tau,
                                       compute_dtype=jnp.float32,
                                       force_tiles=(8, 128)))
    ref2 = jax.block_until_ready(_reference_loss(C1, C2, tau))
    np.testing.assert_allclose(np.asarray(loss_tiled), np.asarray(ref2),
                               rtol=1e-2, atol=1e-3)

    print("KERNEL_OK")
</pallas_src>

<mosaic_0001>
module attributes {stable_mosaic.version = 11 : i64} {
  func.func @_circular_stats_kernel(%arg0: i32, %arg1: i32, %arg2: memref<4x256xf32, #tpu.memory_space<vmem>>, %arg3: memref<4x256xf32, #tpu.memory_space<vmem>>, %arg4: memref<8x256xf32, #tpu.memory_space<vmem>>, %arg5: memref<4x8xf32, #tpu.memory_space<vmem>>, %arg6: memref<2x4x8xf32, #tpu.memory_space<vmem>>, %arg7: memref<2x4x1xf32, #tpu.memory_space<vmem>>) attributes {dimension_semantics = [#tpu.dimension_semantics<parallel>, #tpu.dimension_semantics<arbitrary>], iteration_bounds = array<i64: 1, 1>, scalar_prefetch = 0 : i64, scratch_operands = 2 : i64, tpu.core_type = #tpu.core_type<tc>, window_params = [{transform_indices = @transform_0, window_bounds = array<i64: 4, 256>}, {transform_indices = @transform_1, window_bounds = array<i64: 4, 256>}, {transform_indices = @transform_2, window_bounds = array<i64: 8, 256>}, {transform_indices = @transform_3, window_bounds = array<i64: 4, 8>}]} {
    %c0_i32 = arith.constant 0 : i32
    %0 = arith.cmpi eq, %arg1, %c0_i32 : i32
    %1 = arith.extui %0 : i1 to i32
    %c0_i32_0 = arith.constant 0 : i32
    %2 = arith.cmpi ne, %1, %c0_i32_0 : i32
    scf.if %2 {
      %cst_36 = arith.constant 0.000000e+00 : f32
      %57 = vector.broadcast %cst_36 : f32 to vector<2x4x8xf32>
      %c0_37 = arith.constant 0 : index
      %c0_38 = arith.constant 0 : index
      %c0_39 = arith.constant 0 : index
      %58 = vector.load %arg6[%c0_37, %c0_38, %c0_39] : memref<2x4x8xf32, #tpu.memory_space<vmem>>, vector<2x4x8xf32>
      tpu.vector_store %arg6[%c0_37, %c0_38, %c0_39], %57 {strides = array<i32>} : memref<2x4x8xf32, #tpu.memory_space<vmem>>, vector<2x4x8xf32>,
      %cst_40 = arith.constant 0xFF800000 : f32
      %59 = vector.broadcast %cst_40 : f32 to vector<2x4x1xf32>
      %c0_41 = arith.constant 0 : index
      %c0_42 = arith.constant 0 : index
      %c0_43 = arith.constant 0 : index
      %60 = vector.load %arg7[%c0_41, %c0_42, %c0_43] : memref<2x4x1xf32, #tpu.memory_space<vmem>>, vector<2x4x1xf32>
      tpu.vector_store %arg7[%c0_41, %c0_42, %c0_43], %59 {strides = array<i32>} : memref<2x4x1xf32, #tpu.memory_space<vmem>>, vector<2x4x1xf32>,
    } else {
    }
    %c0 = arith.constant 0 : index
    %c0_1 = arith.constant 0 : index
    %3 = vector.load %arg4[%c0, %c0_1] : memref<8x256xf32, #tpu.memory_space<vmem>>, vector<8x256xf32>
    %c0_2 = arith.constant 0 : index
    %c0_3 = arith.constant 0 : index
    %4 = vector.load %arg2[%c0_2, %c0_3] : memref<4x256xf32, #tpu.memory_space<vmem>>, vector<4x256xf32>
    %cst = arith.constant 1.000000e+01 : f32
    %5 = vector.broadcast %cst : f32 to vector<4x256xf32>
    %6 = arith.mulf %4, %5 : vector<4x256xf32>
    %c0_4 = arith.constant 0 : index
    %c0_5 = arith.constant 0 : index
    %c0_6 = arith.constant 0 : index
    %7 = vector.load %arg7[%c0_4, %c0_5, %c0_6] : memref<2x4x1xf32, #tpu.memory_space<vmem>>, vector<1x4x1xf32>
    %8 = vector.shape_cast %7 : vector<1x4x1xf32> to vector<4x1xf32>
    %cst_7 = arith.constant dense<0xFF800000> : vector<4xf32>
    %9 = vector.multi_reduction <maximumf>, %6, %cst_7 [1] : vector<4x256xf32> to vector<4xf32>
    %10 = vector.shape_cast %9 : vector<4xf32> to vector<4x1xf32>
    %11 = arith.maximumf %8, %10 : vector<4x1xf32>
    %12 = vector.broadcast %11 : vector<4x1xf32> to vector<4x256xf32>
    %13 = arith.subf %6, %12 : vector<4x256xf32>
    %14 = math.exp %13 : vector<4x256xf32>
    %c0_8 = arith.constant 0 : index
    %c0_9 = arith.constant 0 : index
    %15 = vector.load %arg3[%c0_8, %c0_9] : memref<4x256xf32, #tpu.memory_space<vmem>>, vector<4x256xf32>
    %cst_10 = arith.constant 1.000000e+01 : f32
    %16 = vector.broadcast %cst_10 : f32 to vector<4x256xf32>
    %17 = arith.mulf %15, %16 : vector<4x256xf32>
    %c1 = arith.constant 1 : index
    %c0_11 = arith.constant 0 : index
    %c0_12 = arith.constant 0 : index
    %18 = vector.load %arg7[%c1, %c0_11, %c0_12] : memref<2x4x1xf32, #tpu.memory_space<vmem>>, vector<1x4x1xf32>
    %19 = vector.shape_cast %18 : vector<1x4x1xf32> to vector<4x1xf32>
    %cst_13 = arith.constant dense<0xFF800000> : vector<4xf32>
    %20 = vector.multi_reduction <maximumf>, %17, %cst_13 [1] : vector<4x256xf32> to vector<4xf32>
    %21 = vector.shape_cast %20 : vector<4xf32> to vector<4x1xf32>
    %22 = arith.maximumf %19, %21 : vector<4x1xf32>
    %23 = vector.broadcast %22 : vector<4x1xf32> to vector<4x256xf32>
    %24 = arith.subf %17, %23 : vector<4x256xf32>
    %25 = math.exp %24 : vector<4x256xf32>
    %cst_14 = arith.constant dense<0.000000e+00> : vector<4x8xf32>
    %26 = tpu.matmul %14, %3, %cst_14 {dimension_numbers = #tpu.dot_dimension_numbers<[1], [1], [0], [0], [0, 0, 1, 0], [], []>} : vector<4x256xf32>, vector<8x256xf32>, vector<4x8xf32> -> vector<4x8xf32>
    %cst_15 = arith.constant dense<0.000000e+00> : vector<4x8xf32>
    %27 = tpu.matmul %25, %3, %cst_15 {dimension_numbers = #tpu.dot_dimension_numbers<[1], [1], [0], [0], [0, 0, 1, 0], [], []>} : vector<4x256xf32>, vector<8x256xf32>, vector<4x8xf32> -> vector<4x8xf32>
    %28 = arith.subf %8, %11 : vector<4x1xf32>
    %29 = math.exp %28 : vector<4x1xf32>
    %c0_16 = arith.constant 0 : index
    %c0_17 = arith.constant 0 : index
    %c0_18 = arith.constant 0 : index
    %30 = vector.load %arg6[%c0_16, %c0_17, %c0_18] : memref<2x4x8xf32, #tpu.memory_space<vmem>>, vector<1x4x8xf32>
    %31 = vector.shape_cast %30 : vector<1x4x8xf32> to vector<4x8xf32>
    %32 = vector.broadcast %29 : vector<4x1xf32> to vector<4x8xf32>
    %33 = arith.mulf %32, %31 : vector<4x8xf32>
    %34 = arith.addf %33, %26 : vector<4x8xf32>
    %c0_19 = arith.constant 0 : index
    %c0_20 = arith.constant 0 : index
    %c0_21 = arith.constant 0 : index
    %35 = vector.load %arg6[%c0_19, %c0_20, %c0_21] : memref<2x4x8xf32, #tpu.memory_space<vmem>>, vector<1x4x8xf32>
    %36 = vector.shape_cast %35 : vector<1x4x8xf32> to vector<4x8xf32>
    %37 = vector.shape_cast %34 : vector<4x8xf32> to vector<1x4x8xf32>
    tpu.vector_store %arg6[%c0_19, %c0_20, %c0_21], %37 {strides = array<i32>} : memref<2x4x8xf32, #tpu.memory_space<vmem>>, vector<1x4x8xf32>,
    %38 = arith.subf %19, %22 : vector<4x1xf32>
    %39 = math.exp %38 : vector<4x1xf32>
    %c1_22 = arith.constant 1 : index
    %c0_23 = arith.constant 0 : index
    %c0_24 = arith.constant 0 : index
    %40 = vector.load %arg6[%c1_22, %c0_23, %c0_24] : memref<2x4x8xf32, #tpu.memory_space<vmem>>, vector<1x4x8xf32>
    %41 = vector.shape_cast %40 : vector<1x4x8xf32> to vector<4x8xf32>
    %42 = vector.broadcast %39 : vector<4x1xf32> to vector<4x8xf32>
    %43 = arith.mulf %42, %41 : vector<4x8xf32>
    %44 = arith.addf %43, %27 : vector<4x8xf32>
    %c1_25 = arith.constant 1 : index
    %c0_26 = arith.constant 0 : index
    %c0_27 = arith.constant 0 : index
    %45 = vector.load %arg6[%c1_25, %c0_26, %c0_27] : memref<2x4x8xf32, #tpu.memory_space<vmem>>, vector<1x4x8xf32>
    %46 = vector.shape_cast %45 : vector<1x4x8xf32> to vector<4x8xf32>
    %47 = vector.shape_cast %44 : vector<4x8xf32> to vector<1x4x8xf32>
    tpu.vector_store %arg6[%c1_25, %c0_26, %c0_27], %47 {strides = array<i32>} : memref<2x4x8xf32, #tpu.memory_space<vmem>>, vector<1x4x8xf32>,
    %c0_28 = arith.constant 0 : index
    %c0_29 = arith.constant 0 : index
    %c0_30 = arith.constant 0 : index
    %48 = vector.load %arg7[%c0_28, %c0_29, %c0_30] : memref<2x4x1xf32, #tpu.memory_space<vmem>>, vector<1x4x1xf32>
    %49 = vector.shape_cast %48 : vector<1x4x1xf32> to vector<4x1xf32>
    %50 = vector.shape_cast %11 : vector<4x1xf32> to vector<1x4x1xf32>
    tpu.vector_store %arg7[%c0_28, %c0_29, %c0_30], %50 {strides = array<i32>} : memref<2x4x1xf32, #tpu.memory_space<vmem>>, vector<1x4x1xf32>,
    %c1_31 = arith.constant 1 : index
    %c0_32 = arith.constant 0 : index
    %c0_33 = arith.constant 0 : index
    %51 = vector.load %arg7[%c1_31, %c0_32, %c0_33] : memref<2x4x1xf32, #tpu.memory_space<vmem>>, vector<1x4x1xf32>
    %52 = vector.shape_cast %51 : vector<1x4x1xf32> to vector<4x1xf32>
    %53 = vector.shape_cast %22 : vector<4x1xf32> to vector<1x4x1xf32>
    tpu.vector_store %arg7[%c1_31, %c0_32, %c0_33], %53 {strides = array<i32>} : memref<2x4x1xf32, #tpu.memory_space<vmem>>, vector<1x4x1xf32>,
    %c0_i32_34 = arith.constant 0 : i32
    %54 = arith.cmpi eq, %arg1, %c0_i32_34 : i32
    %55 = arith.extui %54 : i1 to i32
    %c0_i32_35 = arith.constant 0 : i32
    %56 = arith.cmpi ne, %55, %c0_i32_35 : i32
    scf.if %56 {
      %c0_36 = arith.constant 0 : index
      %c0_37 = arith.constant 0 : index
      %c0_38 = arith.constant 0 : index
      %57 = vector.load %arg6[%c0_36, %c0_37, %c0_38] : memref<2x4x8xf32, #tpu.memory_space<vmem>>, vector<1x4x8xf32>
      %58 = vector.shape_cast %57 : vector<1x4x8xf32> to vector<4x8xf32>
      %59 = vector.extract_strided_slice %58 {offsets = [0, 0], sizes = [4, 4], strides = [1, 1]} : vector<4x8xf32> to vector<4x4xf32>
      %60 = vector.extract_strided_slice %58 {offsets = [0, 4], sizes = [4, 1], strides = [1, 1]} : vector<4x8xf32> to vector<4x1xf32>
      %61 = tpu.reciprocal %60 {approx = true} : vector<4x1xf32> -> vector<4x1xf32>
      %62 = vector.broadcast %61 : vector<4x1xf32> to vector<4x4xf32>
      %63 = arith.mulf %59, %62 : vector<4x4xf32>
      %c0_39 = arith.constant 0 : index
      %c0_40 = arith.constant 0 : index
      %64 = vector.load %arg5[%c0_39, %c0_40] : memref<4x8xf32, #tpu.memory_space<vmem>>, vector<4x4xf32>
      tpu.vector_store %arg5[%c0_39, %c0_40], %63 {strides = array<i32>} : memref<4x8xf32, #tpu.memory_space<vmem>>, vector<4x4xf32>,
      %c1_41 = arith.constant 1 : index
      %c0_42 = arith.constant 0 : index
      %c0_43 = arith.constant 0 : index
      %65 = vector.load %arg6[%c1_41, %c0_42, %c0_43] : memref<2x4x8xf32, #tpu.memory_space<vmem>>, vector<1x4x8xf32>
      %66 = vector.shape_cast %65 : vector<1x4x8xf32> to vector<4x8xf32>
      %67 = vector.extract_strided_slice %66 {offsets = [0, 0], sizes = [4, 4], strides = [1, 1]} : vector<4x8xf32> to vector<4x4xf32>
      %68 = vector.extract_strided_slice %66 {offsets = [0, 4], sizes = [4, 1], strides = [1, 1]} : vector<4x8xf32> to vector<4x1xf32>
      %69 = tpu.reciprocal %68 {approx = true} : vector<4x1xf32> -> vector<4x1xf32>
      %70 = vector.broadcast %69 : vector<4x1xf32> to vector<4x4xf32>
      %71 = arith.mulf %67, %70 : vector<4x4xf32>
      %c0_44 = arith.constant 0 : index
      %c4 = arith.constant 4 : index
      %72 = vector.load %arg5[%c0_44, %c4] : memref<4x8xf32, #tpu.memory_space<vmem>>, vector<4x4xf32>
      tpu.vector_store %arg5[%c0_44, %c4], %71 {strides = array<i32>} : memref<4x8xf32, #tpu.memory_space<vmem>>, vector<4x4xf32>,
    } else {
    }
    return
  }
  func.func @transform_0(%arg0: i32, %arg1: i32) -> (i32, i32) {
    %c0_i32 = arith.constant 0 : i32
    return %arg0, %arg1 : i32, i32
  }
  func.func @transform_1(%arg0: i32, %arg1: i32) -> (i32, i32) {
    %c0_i32 = arith.constant 0 : i32
    return %arg0, %arg1 : i32, i32
  }
  func.func @transform_2(%arg0: i32, %arg1: i32) -> (i32, i32) {
    %c0_i32 = arith.constant 0 : i32
    %c0_i32_0 = arith.constant 0 : i32
    return %c0_i32, %arg1 : i32, i32
  }
  func.func @transform_3(%arg0: i32, %arg1: i32) -> (i32, i32) {
    %c0_i32 = arith.constant 0 : i32
    %c0_i32_0 = arith.constant 0 : i32
    return %arg0, %c0_i32 : i32, i32
  }
}

</mosaic_0001>

<llo_original>
// kernel: tpu_custom_call.1
$region0: #{tpu_custom_call.1}
  #allocation0 [shape = 'u32[]', space=smem, size = 0x4, offset = 0x4, fixed_abs, tag = 'smem constant byte address 0x4 - core index']
  #allocation1 [shape = 'u32[144,128]{1,0:T(1,128)}', space=vmem, size = 0x12000, scoped, tag = 'internal scratch']
  #allocation2 [shape = 'f32[2,4,8]{2,1,0:T(4,128)}', space=vmem, size = 0x1000, scoped, tag = 'scratch operand']
  #allocation3 [shape = 'f32[2,4,1]{2,1,0:T(4,128)}', space=vmem, size = 0x1000, scoped, tag = 'scratch operand']
  %s0 = inlined_call_operand.hbm [shape: f32[4,256], index: 0, kind: input, shape index: {}]
  %s1 = inlined_call_operand.hbm [shape: f32[4,256], index: 1, kind: input, shape index: {}]
  %s2 = inlined_call_operand.hbm [shape: f32[8,256], index: 2, kind: input, shape index: {}]
  %s3 = inlined_call_operand.hbm [shape: f32[4,8], index: 3, kind: output, shape index: {}]
  %s4 = sld [smem:[#allocation0]]
  $region42: #{tpu_custom_call.1} parent=0
    _
  %s6 = ssub.s32 1, %s4
  %s7 = scalar_select 0, %s6, %s4
  $region1: #{tpu_custom_call.1} parent=0
    #allocation4 [shape = 'u8[4096]{0}', space=vmem, size = 0x1000, scoped, tag = 'input window, operand 0, single buffered']
    #allocation5 [shape = 's32[1]{0}', space=sflag, size = 0x4, scoped, tag = 'scoped memory for tpu_custom_call.1']
    #allocation6 [shape = 's32[1]{0}', space=sflag, size = 0x4, scoped, tag = 'scoped memory for tpu_custom_call.1']
    #allocation7 [shape = 'u8[4096]{0}', space=vmem, size = 0x1000, scoped, tag = 'input window, operand 1, single buffered']
    #allocation8 [shape = 's32[1]{0}', space=sflag, size = 0x4, scoped, tag = 'scoped memory for tpu_custom_call.1']
    #allocation9 [shape = 'u8[8192]{0}', space=vmem, size = 0x2000, scoped, tag = 'input window, operand 2, single buffered']
    #allocation10 [shape = 'u8[2048]{0}', space=vmem, size = 0x800, scoped, tag = 'output window, operand 0, single buffered']
    %8 = vsyncpa [#allocation5], 0
    %9 = vsyncpa [#allocation8], 0
    %10 = vsyncpa [#allocation6], 0
    // Predicated region
    $region2: #{tpu_custom_call.1} parent=1 // pred_check
      _
    $region3: #{tpu_custom_call.1} parent=1 // pred_check_branch
      %12 = sbr.rel (0) target = $region5
    $region4: #{tpu_custom_call.1} parent=1 // pred_region
      %s14 = ssub.s32 128, 128
      %15 = vsyncadd [#allocation5], %s14
      %s17 = sshll.u32 [#allocation4], 4
      %s18 = int_to_ptr.vmem [resolvable:$true] %s17
      %20 = dma.hbm_to_vmem [thread:$0]  %s0, 128, %s18, [#allocation5]
    $region5: #{tpu_custom_call.1} parent=1 // pred_fallthru
      _
    // Predicated region
    $region6: #{tpu_custom_call.1} parent=1 // pred_check
      _
    $region7: #{tpu_custom_call.1} parent=1 // pred_check_branch
      %22 = sbr.rel (0) target = $region9
    $region8: #{tpu_custom_call.1} parent=1 // pred_region
      %s24 = ssub.s32 128, 128
      %25 = vsyncadd [#allocation8], %s24
      %s27 = sshll.u32 [#allocation7], 4
      %s28 = int_to_ptr.vmem [resolvable:$true] %s27
      %30 = dma.hbm_to_vmem [thread:$0]  %s1, 128, %s28, [#allocation8]
    $region9: #{tpu_custom_call.1} parent=1 // pred_fallthru
      _
    // Predicated region
    $region10: #{tpu_custom_call.1} parent=1 // pred_check
      _
    $region11: #{tpu_custom_call.1} parent=1 // pred_check_branch
      %32 = sbr.rel (0) target = $region13
    $region12: #{tpu_custom_call.1} parent=1 // pred_region
      %s34 = ssub.s32 256, 256
      %35 = vsyncadd [#allocation8], %s34
      %s37 = sshll.u32 [#allocation9], 4
      %s38 = int_to_ptr.vmem [resolvable:$true] %s37
      %40 = dma.hbm_to_vmem [thread:$0]  %s2, 256, %s38, [#allocation8]
    $region13: #{tpu_custom_call.1} parent=1 // pred_fallthru
      _
    // Predicated region
    $region14: #{tpu_custom_call.1} parent=1 // pred_check
      _
    $region15: #{tpu_custom_call.1} parent=1 // pred_check_branch
      %42 = sbr.rel (0) target = $region17
    $region16: #{tpu_custom_call.1} parent=1 // pred_region
      %43 = dma.done [#allocation5], 128
    $region17: #{tpu_custom_call.1} parent=1 // pred_fallthru
      _
    // Predicated region
    $region18: #{tpu_custom_call.1} parent=1 // pred_check
      _
    $region19: #{tpu_custom_call.1} parent=1 // pred_check_branch
      %45 = sbr.rel (0) target = $region21
    $region20: #{tpu_custom_call.1} parent=1 // pred_region
      %46 = dma.done [#allocation8], 128
    $region21: #{tpu_custom_call.1} parent=1 // pred_fallthru
      _
    // Predicated region
    $region22: #{tpu_custom_call.1} parent=1 // pred_check
      _
    $region23: #{tpu_custom_call.1} parent=1 // pred_check_branch
      %48 = sbr.rel (0) target = $region25
    $region24: #{tpu_custom_call.1} parent=1 // pred_region
      %49 = dma.done [#allocation8], 256
    $region25: #{tpu_custom_call.1} parent=1 // pred_fallthru
      _
    %p50 = scmp.eq.s32.totalorder 0, 0
    // Predicated region
    $region26: #{tpu_custom_call.1} parent=1 // pred_check
      %p51 = pneg %p50
    $region27: #{tpu_custom_call.1} parent=1 // pred_check_branch
      %53 = sbr.rel (%p51) target = $region29
    $region28: #{tpu_custom_call.1} parent=1 // pred_region
      %vm54 = vcmask 60416
      %55 = vst.msk [vmem:[#allocation2] sm:$0xf] %vm54, 0.0
      %56 = vst.msk [vmem:[#allocation2 + $0x4] sm:$0xf] %vm54, 0.0
      %vm57 = vcmask 3072
      %58 = vst.msk [vmem:[#allocation3] sm:$0xf] %vm57, -inf
      %59 = vst.msk [vmem:[#allocation3 + $0x4] sm:$0xf] %vm57, -inf
    $region29: #{tpu_custom_call.1} parent=1 // pred_fallthru
      _
    %v60 = vld [vmem:[#allocation9] sm:$0xff]
    %v61 = vld [vmem:[#allocation9 + $0x8] sm:$0xff]
    %v62 = vld [vmem:[#allocation4] sm:$0xff]
    %v63 = vmul.f32 %v62, 10.0
    %v64 = vld [vmem:[#allocation3] sm:$0xf]
    %v66 = vcombine.high %v63, %v63
    %vm68 = vcmask 1043456
    %v69 = vsel %vm68, %v63, -inf
    %v70 = vsel %vm68, %v66, -inf
    %v71 = vmax.f32 %v69, %v70
    %72 = vmax.xlane.f32.xlu0 %v71
    %v73 = vpop.xlane.xlu0 %72
    %v74 = vmax.f32 %v64, %v73
    %76 = vset.pattern.permute.xlu0 0
    %77 = vperm.xlu0 %76, %v74
    %v78 = vpop.permute.xlu0 %77
    %v80 = vunpack.c.l.s4 839922192
    %v81 = vunpack.c.0.s8 %v80
    %v82 = vlaneseq
    %v83 = vshrl.u32 %v82, 7
    %v84 = vsub.s32 %v81, %v83
    %v85 = vrot.slane %v78, %v84
    %v87 = vsub.f32 %v63, %v85
    %v88 = vmul.f32 %v87, 1.442695
    %v89 = vpow.pop %v88
    %v90 = vld [vmem:[#allocation7] sm:$0xff]
    %v91 = vmul.f32 %v90, 10.0
    %s92 = scalar_lea.vmem [#allocation3], 4
    %v93 = vld [vmem:[%s92] sm:$0xf]
    %v95 = vcombine.high %v91, %v91
    %v97 = vsel %vm68, %v91, -inf
    %v98 = vsel %vm68, %v95, -inf
    %v99 = vmax.f32 %v97, %v98
    %100 = vmax.xlane.f32.xlu0 %v99
    %v101 = vpop.xlane.xlu0 %100
    %v102 = vmax.f32 %v93, %v101
    %104 = vset.pattern.permute.xlu0 0
    %105 = vperm.xlu0 %104, %v102
    %v106 = vpop.permute.xlu0 %105
    %v108 = vunpack.c.l.s4 839922192
    %v109 = vunpack.c.0.s8 %v108
    %v110 = vlaneseq
    %v111 = vshrl.u32 %v110, 7
    %v112 = vsub.s32 %v109, %v111
    %v113 = vrot.slane %v106, %v112
    %v115 = vsub.f32 %v91, %v113
    %v116 = vmul.f32 %v115, 1.442695
    %v117 = vpow.pop %v116
    %v119 = vcombine.high %v89, %v89
    %121 = vmatprep.subr.mxu0 %v61
    %122 = vmatpush1.xpose.msra.mxu0 %v60
    %123 = vmatprep.subr.mxu0 0.0
    %124 = vmatpush1.xpose.msra.mxu0 0.0
    %125 = vmatprep.subr.mxu0 0.0
    %126 = vmatpush1.xpose.msra.mxu0 0.0
    %127 = vmatprep.subr.mxu0 0.0
    %128 = vmatpush1.xpose.msra.mxu0 0.0
    %129 = vmatprep.subr.mxu0 0.0
    %130 = vmatpush1.xpose.msra.mxu0 0.0
    %131 = vmatprep.subr.mxu0 0.0
    %132 = vmatpush1.xpose.msra.mxu0 0.0
    %133 = vmatprep.subr.mxu0 0.0
    %134 = vmatpush1.xpose.msra.mxu0 0.0
    %135 = vmatprep.subr.mxu0 0.0
    %136 = vmatpush1.xpose.msra.mxu0 0.0
    %137 = vmatprep.subr.mxu0 0.0
    %138 = vmatpush1.xpose.msra.mxu0 0.0
    %139 = vmatprep.subr.mxu0 0.0
    %140 = vmatpush1.xpose.msra.mxu0 0.0
    %141 = vmatprep.subr.mxu0 0.0
    %142 = vmatpush1.xpose.msra.mxu0 0.0
    %143 = vmatprep.subr.mxu0 0.0
    %144 = vmatpush1.xpose.msra.mxu0 0.0
    %145 = vmatprep.subr.mxu0 0.0
    %146 = vmatpush1.xpose.msra.mxu0 0.0
    %147 = vmatprep.subr.mxu0 0.0
    %148 = vmatpush1.xpose.msra.mxu0 0.0
    %149 = vmatprep.subr.mxu0 0.0
    %150 = vmatpush1.xpose.msra.mxu0 0.0
    %151 = vmatprep.subr.mxu0 0.0
    %152 = vmatpush1.xpose.msra.mxu0 0.0
    %153 = vmatprep.subr.mxu0 0.0
    %154 = vmatpush1.xpose.msra.mxu0 0.0
    %155 = vmatprep.subr.mxu0 0.0
    %156 = vmatpush1.xpose.msra.mxu0 0.0
    %157 = vmatprep.subr.mxu0 0.0
    %158 = vmatpush1.xpose.msra.mxu0 0.0
    %159 = vmatprep.subr.mxu0 0.0
    %160 = vmatpush1.xpose.msra.mxu0 0.0
    %161 = vmatprep.subr.mxu0 0.0
    %162 = vmatpush1.xpose.msra.mxu0 0.0
    %163 = vmatprep.subr.mxu0 0.0
    %164 = vmatpush1.xpose.msra.mxu0 0.0
    %165 = vmatprep.subr.mxu0 0.0
    %166 = vmatpush1.xpose.msra.mxu0 0.0
    %167 = vmatprep.subr.mxu0 0.0
    %168 = vmatpush1.xpose.msra.mxu0 0.0
    %169 = vmatprep.subr.mxu0 0.0
    %170 = vmatpush1.xpose.msra.mxu0 0.0
    %171 = vmatprep.subr.mxu0 0.0
    %172 = vmatpush1.xpose.msra.mxu0 0.0
    %173 = vmatprep.subr.mxu0 0.0
    %174 = vmatpush1.xpose.msra.mxu0 0.0
    %175 = vmatprep.subr.mxu0 0.0
    %176 = vmatpush1.xpose.msra.mxu0 0.0
    %177 = vmatprep.subr.mxu0 0.0
    %178 = vmatpush1.xpose.msra.mxu0 0.0
    %179 = vmatprep.subr.mxu0 0.0
    %180 = vmatpush1.xpose.msra.mxu0 0.0
    %181 = vmatprep.subr.mxu0 0.0
    %182 = vmatpush1.xpose.msra.mxu0 0.0
    %183 = vmatprep.subr.mxu0 0.0
    %184 = vmatpush1.xpose.msra.mxu0 0.0
    %185 = vmatprep.mubr.f32.mxu0 %v119
    %186 = vmatmul.mubr.f32.gmra.mrb[0].mxu0 %v89
    %v187 = vpop.f32.mrb[0].mxu0
    %v188 = vadd.f32 0.0, %v187
    %v189 = vpop.f32.mrb[0].mxu0
    %190 = vdwg.mxu0
    %v192 = vcombine.high %v117, %v117
    %194 = vmatprep.subr.mxu0 %v61
    %195 = vmatpush1.xpose.msra.mxu0 %v60
    %196 = vmatprep.subr.mxu0 0.0
    %197 = vmatpush1.xpose.msra.mxu0 0.0
    %198 = vmatprep.subr.mxu0 0.0
    %199 = vmatpush1.xpose.msra.mxu0 0.0
    %200 = vmatprep.subr.mxu0 0.0
    %201 = vmatpush1.xpose.msra.mxu0 0.0
    %202 = vmatprep.subr.mxu0 0.0
    %203 = vmatpush1.xpose.msra.mxu0 0.0
    %204 = vmatprep.subr.mxu0 0.0
    %205 = vmatpush1.xpose.msra.mxu0 0.0
    %206 = vmatprep.subr.mxu0 0.0
    %207 = vmatpush1.xpose.msra.mxu0 0.0
    %208 = vmatprep.subr.mxu0 0.0
    %209 = vmatpush1.xpose.msra.mxu0 0.0
    %210 = vmatprep.subr.mxu0 0.0
    %211 = vmatpush1.xpose.msra.mxu0 0.0
    %212 = vmatprep.subr.mxu0 0.0
    %213 = vmatpush1.xpose.msra.mxu0 0.0
    %214 = vmatprep.subr.mxu0 0.0
    %215 = vmatpush1.xpose.msra.mxu0 0.0
    %216 = vmatprep.subr.mxu0 0.0
    %217 = vmatpush1.xpose.msra.mxu0 0.0
    %218 = vmatprep.subr.mxu0 0.0
    %219 = vmatpush1.xpose.msra.mxu0 0.0
    %220 = vmatprep.subr.mxu0 0.0
    %221 = vmatpush1.xpose.msra.mxu0 0.0
    %222 = vmatprep.subr.mxu0 0.0
    %223 = vmatpush1.xpose.msra.mxu0 0.0
    %224 = vmatprep.subr.mxu0 0.0
    %225 = vmatpush1.xpose.msra.mxu0 0.0
    %226 = vmatprep.subr.mxu0 0.0
    %227 = vmatpush1.xpose.msra.mxu0 0.0
    %228 = vmatprep.subr.mxu0 0.0
    %229 = vmatpush1.xpose.msra.mxu0 0.0
    %230 = vmatprep.subr.mxu0 0.0
    %231 = vmatpush1.xpose.msra.mxu0 0.0
    %232 = vmatprep.subr.mxu0 0.0
    %233 = vmatpush1.xpose.msra.mxu0 0.0
    %234 = vmatprep.subr.mxu0 0.0
    %235 = vmatpush1.xpose.msra.mxu0 0.0
    %236 = vmatprep.subr.mxu0 0.0
    %237 = vmatpush1.xpose.msra.mxu0 0.0
    %238 = vmatprep.subr.mxu0 0.0
    %239 = vmatpush1.xpose.msra.mxu0 0.0
    %240 = vmatprep.subr.mxu0 0.0
    %241 = vmatpush1.xpose.msra.mxu0 0.0
    %242 = vmatprep.subr.mxu0 0.0
    %243 = vmatpush1.xpose.msra.mxu0 0.0
    %244 = vmatprep.subr.mxu0 0.0
    %245 = vmatpush1.xpose.msra.mxu0 0.0
    %246 = vmatprep.subr.mxu0 0.0
    %247 = vmatpush1.xpose.msra.mxu0 0.0
    %248 = vmatprep.subr.mxu0 0.0
    %249 = vmatpush1.xpose.msra.mxu0 0.0
    %250 = vmatprep.subr.mxu0 0.0
    %251 = vmatpush1.xpose.msra.mxu0 0.0
    %252 = vmatprep.subr.mxu0 0.0
    %253 = vmatpush1.xpose.msra.mxu0 0.0
    %254 = vmatprep.subr.mxu0 0.0
    %255 = vmatpush1.xpose.msra.mxu0 0.0
    %256 = vmatprep.subr.mxu0 0.0
    %257 = vmatpush1.xpose.msra.mxu0 0.0
    %258 = vmatprep.mubr.f32.mxu0 %v192
    %259 = vmatmul.mubr.f32.gmra.mrb[0].mxu0 %v117
    %v260 = vpop.f32.mrb[0].mxu0
    %v261 = vadd.f32 0.0, %v260
    %v262 = vpop.f32.mrb[0].mxu0
    %263 = vdwg.mxu0
    %v264 = vsub.f32 %v64, %v74
    %v265 = vmul.f32 %v264, 1.442695
    %v266 = vpow.pop %v265
    %v267 = vld [vmem:[#allocation2] sm:$0xf]
    %269 = vset.pattern.permute.xlu0 0
    %270 = vperm.xlu0 %269, %v266
    %v271 = vpop.permute.xlu0 %270
    %v273 = vmul.f32 %v271, %v267
    %v274 = vadd.f32 %v273, %v188
    %vm275 = vcmask 60416
    %276 = vst.msk [vmem:[#allocation2] sm:$0xf] %vm275, %v274
    %v277 = vsub.f32 %v93, %v102
    %v278 = vmul.f32 %v277, 1.442695
    %v279 = vpow.pop %v278
    %s280 = scalar_lea.vmem [#allocation2], 4
    %v281 = vld [vmem:[%s280] sm:$0xf]
    %283 = vset.pattern.permute.xlu0 0
    %284 = vperm.xlu0 %283, %v279
    %v285 = vpop.permute.xlu0 %284
    %v287 = vmul.f32 %v285, %v281
    %v288 = vadd.f32 %v287, %v261
    %289 = vst.msk [vmem:[%s280] sm:$0xf] %vm275, %v288
    %vm290 = vcmask 3072
    %291 = vst.msk [vmem:[#allocation3] sm:$0xf] %vm290, %v74
    %292 = vst.msk [vmem:[%s92] sm:$0xf] %vm290, %v102
    // Predicated region
    $region30: #{tpu_custom_call.1} parent=1 // pred_check
      %p293 = pneg %p50
    $region31: #{tpu_custom_call.1} parent=1 // pred_check_branch
      %295 = sbr.rel (%p293) target = $region33
    $region32: #{tpu_custom_call.1} parent=1 // pred_region
      %v296 = vld [vmem:[#allocation2] sm:$0xf]
      %v297 = vrcp.pop %v296
      %299 = vset.pattern.permute.xlu0 4
      %300 = vperm.xlu0 %299, %v297
      %v301 = vpop.permute.xlu0 %300
      %v303 = vmul.f32 %v296, %v301
      %vm304 = vcmask 27648
      %305 = vst.msk [vmem:[#allocation10] sm:$0xf] %vm304, %v303
      %v306 = vld [vmem:[%s280] sm:$0xf]
      %v307 = vrcp.pop %v306
      %309 = vset.pattern.permute.xlu0 4
      %310 = vperm.xlu0 %309, %v307
      %v311 = vpop.permute.xlu0 %310
      %v313 = vmul.f32 %v306, %v311
      %315 = vrot.lane.b32.xlu0 %v313, 4
      %v316 = vpop.permute.xlu0 %315
      %vm318 = vcmask 60448
      %319 = vst.msk [vmem:[#allocation10] sm:$0xf] %vm318, %v316
    $region33: #{tpu_custom_call.1} parent=1 // pred_fallthru
      _
    // Predicated region
    $region34: #{tpu_custom_call.1} parent=1 // pred_check
      _
    $region35: #{tpu_custom_call.1} parent=1 // pred_check_branch
      %321 = sbr.rel (0) target = $region37
    $region36: #{tpu_custom_call.1} parent=1 // pred_region
      %s323 = ssub.s32 64, 64
      %324 = vsyncadd [#allocation6], %s323
      %s326 = sshll.u32 [#allocation10], 4
      %s327 = int_to_ptr.vmem [resolvable:$true] %s326
      %329 = dma.vmem_to_hbm [thread:$0]  %s327, 64, %s3, [#allocation6]
    $region37: #{tpu_custom_call.1} parent=1 // pred_fallthru
      _
    // Predicated region
    $region38: #{tpu_custom_call.1} parent=1 // pred_check
      _
    $region39: #{tpu_custom_call.1} parent=1 // pred_check_branch
      %331 = sbr.rel (0) target = $region41
    $region40: #{tpu_custom_call.1} parent=1 // pred_region
      %332 = dma.done [#allocation6], 64
    $region41: #{tpu_custom_call.1} parent=1 // pred_fallthru
      _
    %333 = vsyncpa [#allocation5], 1
    %334 = vsyncpa [#allocation8], 1
    %335 = vsyncpa [#allocation6], 1

</llo_original>
